<compile_context>
chip_gen: v5e
topology: v5e:2x2
jax: 0.10.0
libtpu: 0.0.40
codegen_flags: <defaults>
</compile_context>

<pallas_src>
import functools
import math

import jax
import jax.numpy as jnp
from jax.experimental import pallas as pl
from jax.experimental.pallas import tpu as pltpu


def _round_up(x, m):
    return (x + m - 1) // m * m


def _vmem_capacity_bytes():
    """Best-effort physical VMEM size (v5e/v6e: 128 MiB, v7x: 64 MiB)."""
    try:
        cap = getattr(pltpu.get_tpu_info(), "vmem_capacity_bytes", None)
        if cap:
            return int(cap)
    except Exception:
        pass
    return 64 * 1024 * 1024  # conservative default (v7x)


def _pick_batch_block(b, tq, max_rows):
    """Largest divisor of b that keeps >=2 batch grid steps (dual-TC chips) and a modest block."""
    cap = b if b < 2 else b // 2
    best = 1
    for cand in range(1, b + 1):
        if b % cand == 0 and cand <= cap and cand * tq <= max_rows:
            best = cand
    return best


# ----------------------------- projection pre-pass kernels -----------------------------

def _proj_fused_kernel(x_ref, w_ref, b_ref, qkv_ref):
    """Self-attention fast path (q is k is v): one matmul with N = 3*att_p."""
    x = x_ref[0].astype(jnp.bfloat16)
    p = jnp.dot(x, w_ref[...], preferred_element_type=jnp.float32) + b_ref[...]
    qkv_ref[0] = p.astype(qkv_ref.dtype)


def _proj_separate_kernel(q_ref, k_ref, v_ref, wq_ref, bq_ref, wk_ref, bk_ref,
                          wv_ref, bv_ref, qkv_ref):
    """Cross-attention path: three projections written into one fused [Q|K|V] slab."""
    att_p = wq_ref.shape[1]

    def proj(x_ref, w_ref, b_ref):
        x = x_ref[0].astype(jnp.bfloat16)
        return (jnp.dot(x, w_ref[...], preferred_element_type=jnp.float32)
                + b_ref[...]).astype(qkv_ref.dtype)

    qkv_ref[0, :, 0:att_p] = proj(q_ref, wq_ref, bq_ref)
    qkv_ref[0, :, att_p:2 * att_p] = proj(k_ref, wk_ref, bk_ref)
    qkv_ref[0, :, 2 * att_p:3 * att_p] = proj(v_ref, wv_ref, bv_ref)


# --------------------------------- attention kernel ------------------------------------

def _attention_kernel(qp_ref, kp_ref, vp_ref, wo_ref, bo_ref, o_ref, acc,
                      *, s_true, need_mask):
    bb, tq, att_p = qp_ref.shape
    _, tk, _ = kp_ref.shape
    amp_p = wo_ref.shape[1]
    ki = pl.program_id(2)

    @pl.when(ki == 0)
    def _():
        acc[...] = jnp.zeros_like(acc)

    # bf16 MXU operands, f32 accumulation; contraction on the shared last dim (no K transpose).
    # 1/sqrt(d_k) is pre-folded into the Q projection.
    scores = jnp.einsum("bqe,bke->bqk", qp_ref[...], kp_ref[...],
                        preferred_element_type=jnp.float32)
    # sigmoid(x) = 0.5*(tanh(0.5*x)+1): single EUP op (f32 so it is also valid on v5e).
    scores = 0.5 * (jnp.tanh(0.5 * scores) + 1.0)
    if need_mask:
        # Padded key rows must contribute exactly zero (sigmoid(0)=0.5 otherwise).
        key_pos = ki * tk + jax.lax.broadcasted_iota(jnp.int32, scores.shape, 2)
        scores = jnp.where(key_pos < s_true, scores, 0.0)

    # Sigmoid attention has no softmax normalisation -> plain streaming sum over key tiles.
    acc[...] += jnp.einsum("bqk,bke->bqe", scores.astype(vp_ref.dtype), vp_ref[...],
                           preferred_element_type=jnp.float32)

    @pl.when(ki == pl.num_programs(2) - 1)
    def _():
        am = acc[...].reshape(bb * tq, att_p).astype(wo_ref.dtype)
        out = jnp.dot(am, wo_ref[...], preferred_element_type=jnp.float32) + bo_ref[...]
        o_ref[...] = out.reshape(bb, tq, amp_p).astype(o_ref.dtype)


# -------------------------------------- wrapper -----------------------------------------

def self_attention_layer(q, k, v, params, d_k=None):
    """Forward pass of SelfAttentionlayer.  q/k/v: (B, S, amp_dim)."""
    B, S, amp_dim = q.shape
    att_dim = params["wq"].shape[1]
    if d_k is None:
        d_k = amp_dim  # matches the PyTorch module (self.d_k = amp_dim)
    scale = 1.0 / math.sqrt(d_k)
    f32, bf16 = jnp.float32, jnp.bfloat16

    amp_al = _round_up(amp_dim, 8)    # contraction dim: sublane-aligned only (no 128 re-pad)
    att_p = _round_up(att_dim, 128)   # projected feature dim: lane-dense 128 multiple
    amp_p = _round_up(amp_dim, 128)   # lane-dense output slab

    # Weights: pad lane dims to 128 multiples, contraction dims to multiples of 8;
    # fold 1/sqrt(d_k) into the Q projection; bf16 MXU operands (biases stay f32).
    def pad2(w, rows, cols):
        return jnp.pad(w, ((0, rows - w.shape[0]), (0, cols - w.shape[1])))

    wq = pad2(params["wq"].astype(f32) * scale, amp_al, att_p).astype(bf16)
    wk = pad2(params["wk"].astype(f32), amp_al, att_p).astype(bf16)
    wv = pad2(params["wv"].astype(f32), amp_al, att_p).astype(bf16)
    bq = pad2(params["bq"].astype(f32).reshape(1, -1) * scale, 1, att_p)
    bk = pad2(params["bk"].astype(f32).reshape(1, -1), 1, att_p)
    bv = pad2(params["bv"].astype(f32).reshape(1, -1), 1, att_p)
    wo = pad2(params["wo"].astype(f32), att_p, amp_p).astype(bf16)
    bo = pad2(params["bo"].astype(f32).reshape(1, -1), 1, amp_p)
    # TODO(synk): cache the padded/scaled weights across calls instead of re-padding each forward.

    # Generation-aware VMEM budget and tile caps.
    vmem_cap = _vmem_capacity_bytes()
    big_vmem = vmem_cap >= 96 * 1024 * 1024          # v5e / v6e (128 MiB physical)
    vmem_limit = (100 if big_vmem else 44) * 1024 * 1024
    seq_cap = 1024 if big_vmem else 512
    max_rows = 4096 if big_vmem else 2048

    tq = min(seq_cap, _round_up(S, 8))
    if B == 1 and S > 8 and _round_up(S, tq) // tq < 2:
        # Guarantee >=2 steps on a parallel axis so dual-TensorCore chips (v7x) use both cores.
        tq = _round_up((S + 1) // 2, 8)
    tk = tq
    S_p = _round_up(S, tq)
    bb = _pick_batch_block(B, tq, max_rows)

    def attn_vmem_bytes(bb_, tq_, tk_):
        return (2 * 2 * bb_ * tq_ * att_p                    # Q block (bf16, double-buffered)
                + 2 * 2 * 2 * bb_ * tk_ * att_p              # K + V blocks
                + 2 * (2 * att_p * amp_p + 4 * amp_p)        # Wo (bf16) + bo (f32)
                + 2 * 4 * bb_ * tq_ * amp_p                  # output block (f32)
                + 4 * bb_ * tq_ * att_p                      # f32 accumulator scratch
                + 6 * bb_ * tq_ * tk_)                       # scores temporary (f32 + bf16 copy)

    while attn_vmem_bytes(bb, tq, tk) > 0.8 * vmem_limit:
        if bb > 1:
            bb = max(d for d in range(1, bb) if B % d == 0)  # cheapest knob (scores temp ~ bb)
        elif tk > 128 and tk % 16 == 0:
            tk //= 2
        elif tq > 128 and tq % 16 == 0:
            tq //= 2
        else:
            break

    # Activations keep native feature width (only 8-aligned); only the sequence dim is
    # padded up to a tile multiple, and padded keys are masked inside the kernel.
    fused = (q is k) and (k is v)

    def pad_act(x):
        return jnp.pad(x, ((0, 0), (0, S_p - S), (0, amp_al - amp_dim)))

    tp = tq
    proj_grid = (B, S_p // tp)
    x_spec = pl.BlockSpec((1, tp, amp_al), lambda b, i: (b, i, 0))
    w_spec = lambda r, c: pl.BlockSpec((r, c), lambda b, i: (0, 0))
    qkv_out_spec = pl.BlockSpec((1, tp, 3 * att_p), lambda b, i: (b, i, 0))
    qkv_shape = jax.ShapeDtypeStruct((B, S_p, 3 * att_p), bf16)
    proj_params = pltpu.CompilerParams(dimension_semantics=("parallel", "parallel"),
                                       vmem_limit_bytes=vmem_limit)
    proj_cost = pl.CostEstimate(
        flops=int(2 * B * S_p * amp_al * 3 * att_p), transcendentals=0,
        bytes_accessed=int(4 * (1 if fused else 3) * B * S_p * amp_al
                           + 2 * 3 * amp_al * att_p + 2 * 3 * B * S_p * att_p))

    if fused:
        w_qkv = jnp.concatenate([wq, wk, wv], axis=1)    # (amp_al, 3*att_p) bf16
        b_qkv = jnp.concatenate([bq, bk, bv], axis=1)    # (1, 3*att_p) f32
        qkv = pl.pallas_call(
            _proj_fused_kernel, out_shape=qkv_shape,
            grid_spec=pltpu.PrefetchScalarGridSpec(
                num_scalar_prefetch=0, grid=proj_grid,
                in_specs=[x_spec, w_spec(amp_al, 3 * att_p), w_spec(1, 3 * att_p)],
                out_specs=qkv_out_spec),
            compiler_params=proj_params, cost_estimate=proj_cost,
        )(pad_act(q), w_qkv, b_qkv)
    else:
        qkv = pl.pallas_call(
            _proj_separate_kernel, out_shape=qkv_shape,
            grid_spec=pltpu.PrefetchScalarGridSpec(
                num_scalar_prefetch=0, grid=proj_grid,
                in_specs=[x_spec, x_spec, x_spec,
                          w_spec(amp_al, att_p), w_spec(1, att_p),
                          w_spec(amp_al, att_p), w_spec(1, att_p),
                          w_spec(amp_al, att_p), w_spec(1, att_p)],
                out_specs=qkv_out_spec),
            compiler_params=proj_params, cost_estimate=proj_cost,
        )(pad_act(q), pad_act(k), pad_act(v), wq, bq, wk, bk, wv, bv)

    # Attention + output projection: stream over key tiles with a resident f32 accumulator.
    grid = (B // bb, S_p // tq, S_p // tk)
    attn_kernel = functools.partial(_attention_kernel, s_true=S, need_mask=(S_p != S))
    attn_cost = pl.CostEstimate(
        flops=int(4 * B * S_p * S_p * att_p + 2 * B * S_p * att_p * amp_p),
        transcendentals=int(B * S_p * S_p),
        bytes_accessed=int(2 * B * S_p * att_p
                           + 2 * 2 * B * S_p * att_p * (S_p // tq)   # K/V re-read per query tile
                           + 2 * att_p * amp_p + 4 * amp_p
                           + 4 * B * S_p * amp_p))

    out_padded = pl.pallas_call(
        attn_kernel,
        out_shape=jax.ShapeDtypeStruct((B, S_p, amp_p), q.dtype),
        grid_spec=pltpu.PrefetchScalarGridSpec(
            num_scalar_prefetch=0, grid=grid,
            in_specs=[
                pl.BlockSpec((bb, tq, att_p), lambda b, i, j: (b, i, 0)),  # Q columns of qkv
                pl.BlockSpec((bb, tk, att_p), lambda b, i, j: (b, j, 1)),  # K columns of qkv
                pl.BlockSpec((bb, tk, att_p), lambda b, i, j: (b, j, 2)),  # V columns of qkv
                pl.BlockSpec((att_p, amp_p), lambda b, i, j: (0, 0)),
                pl.BlockSpec((1, amp_p), lambda b, i, j: (0, 0)),
            ],
            out_specs=pl.BlockSpec((bb, tq, amp_p), lambda b, i, j: (b, i, 0)),
            scratch_shapes=[pltpu.VMEM((bb, tq, att_p), jnp.float32)]),
        compiler_params=pltpu.CompilerParams(
            dimension_semantics=("parallel", "parallel", "arbitrary"),
            vmem_limit_bytes=vmem_limit),
        cost_estimate=attn_cost,
    )(qkv, qkv, qkv, wo, bo)

    return out_padded[:, :S, :amp_dim]


# ------------------------------------- references ---------------------------------------

def reference_f32(q, k, v, params, d_k):
    qp = q @ params["wq"] + params["bq"]
    kp = k @ params["wk"] + params["bk"]
    vp = v @ params["wv"] + params["bv"]
    scores = jax.nn.sigmoid(jnp.einsum("bqd,bkd->bqk", qp, kp) / math.sqrt(d_k))
    attn = jnp.einsum("bqk,bkd->bqd", scores, vp)
    return attn @ params["wo"] + params["bo"]


def reference_matched(q, k, v, params, d_k):
    """Pure-JAX reference with the same bf16-operand / f32-accumulate precision as the kernel."""
    bf, f32 = jnp.bfloat16, jnp.float32
    scale = 1.0 / math.sqrt(d_k)

    def lin(x, w, b):
        return jnp.dot(x.astype(bf), w.astype(bf), preferred_element_type=f32) + b.astype(f32)

    qp = lin(q, params["wq"] * scale, params["bq"] * scale).astype(bf)
    kp = lin(k, params["wk"], params["bk"]).astype(bf)
    vp = lin(v, params["wv"], params["bv"]).astype(bf)
    s = jnp.einsum("bqd,bkd->bqk", qp, kp, preferred_element_type=f32)
    s = 0.5 * (jnp.tanh(0.5 * s) + 1.0)
    attn = jnp.einsum("bqk,bkd->bqd", s.astype(bf), vp, preferred_element_type=f32)
    return jnp.dot(attn.astype(bf), params["wo"].astype(bf),
                   preferred_element_type=f32) + params["bo"]


def init_params(key, amp_dim, att_dim):
    """Deterministic init matching PyTorch Linear shapes (weights stored transposed)."""
    ks = jax.random.split(key, 8)

    def u(k_, shape, fan_in):
        bound = 1.0 / math.sqrt(fan_in)
        return jax.random.uniform(k_, shape, jnp.float32, -bound, bound)

    return {
        "wq": u(ks[0], (amp_dim, att_dim), amp_dim),
        "bq": u(ks[1], (att_dim,), amp_dim),
        "wk": u(ks[2], (amp_dim, att_dim), amp_dim),
        "bk": u(ks[3], (att_dim,), amp_dim),
        "wv": u(ks[4], (amp_dim, att_dim), amp_dim),
        "bv": u(ks[5], (att_dim,), amp_dim),
        "wo": u(ks[6], (att_dim, amp_dim), att_dim),
        "bo": u(ks[7], (amp_dim,), att_dim),
    }


if __name__ == "__main__":
    B, S, amp_dim, att_dim = 2, 8, 48, 32

    key = jax.random.PRNGKey(0)
    kq, kk, kv, kp = jax.random.split(key, 4)
    q = jax.random.normal(kq, (B, S, amp_dim), jnp.float32)
    k = jax.random.normal(kk, (B, S, amp_dim), jnp.float32)
    v = jax.random.normal(kv, (B, S, amp_dim), jnp.float32)
    params = init_params(kp, amp_dim, att_dim)

    # Cross-attention path (distinct q/k/v -> separate projection kernel).
    out = jax.block_until_ready(self_attention_layer(q, k, v, params))
    assert out.shape == (B, S, amp_dim)
    assert jnp.allclose(out, reference_matched(q, k, v, params, amp_dim),
                        atol=2e-3, rtol=2e-3), "mismatch vs precision-matched reference"
    assert jnp.allclose(out, reference_f32(q, k, v, params, amp_dim),
                        atol=5e-2, rtol=5e-2), "mismatch vs f32 reference"

    # Self-attention fast path (q is k is v -> fused QKV projection kernel).
    out2 = jax.block_until_ready(self_attention_layer(q, q, q, params))
    assert jnp.allclose(out2, reference_matched(q, q, q, params, amp_dim),
                        atol=2e-3, rtol=2e-3), "fused-path mismatch vs matched reference"

    print("KERNEL_OK")
</pallas_src>

<mosaic_0001>
module attributes {stable_mosaic.version = 11 : i64} {
  func.func @_proj_separate_kernel(%arg0: i32, %arg1: i32, %arg2: memref<1x8x48xf32, #tpu.memory_space<vmem>>, %arg3: memref<1x8x48xf32, #tpu.memory_space<vmem>>, %arg4: memref<1x8x48xf32, #tpu.memory_space<vmem>>, %arg5: memref<48x128xbf16, #tpu.memory_space<vmem>>, %arg6: memref<1x128xf32, #tpu.memory_space<vmem>>, %arg7: memref<48x128xbf16, #tpu.memory_space<vmem>>, %arg8: memref<1x128xf32, #tpu.memory_space<vmem>>, %arg9: memref<48x128xbf16, #tpu.memory_space<vmem>>, %arg10: memref<1x128xf32, #tpu.memory_space<vmem>>, %arg11: memref<1x8x384xbf16, #tpu.memory_space<vmem>>) attributes {dimension_semantics = [#tpu.dimension_semantics<parallel>, #tpu.dimension_semantics<parallel>], iteration_bounds = array<i64: 2, 1>, scalar_prefetch = 0 : i64, scratch_operands = 0 : i64, tpu.core_type = #tpu.core_type<tc>, window_params = [{transform_indices = @transform_0, window_bounds = array<i64: 1, 8, 48>}, {transform_indices = @transform_1, window_bounds = array<i64: 1, 8, 48>}, {transform_indices = @transform_2, window_bounds = array<i64: 1, 8, 48>}, {pipeline_mode = #tpu.pipeline_mode<synchronous>, transform_indices = @transform_3, window_bounds = array<i64: 48, 128>}, {pipeline_mode = #tpu.pipeline_mode<synchronous>, transform_indices = @transform_4, window_bounds = array<i64: 1, 128>}, {pipeline_mode = #tpu.pipeline_mode<synchronous>, transform_indices = @transform_5, window_bounds = array<i64: 48, 128>}, {pipeline_mode = #tpu.pipeline_mode<synchronous>, transform_indices = @transform_6, window_bounds = array<i64: 1, 128>}, {pipeline_mode = #tpu.pipeline_mode<synchronous>, transform_indices = @transform_7, window_bounds = array<i64: 48, 128>}, {pipeline_mode = #tpu.pipeline_mode<synchronous>, transform_indices = @transform_8, window_bounds = array<i64: 1, 128>}, {transform_indices = @transform_9, window_bounds = array<i64: 1, 8, 384>}]} {
    %c0 = arith.constant 0 : index
    %c0_0 = arith.constant 0 : index
    %c0_1 = arith.constant 0 : index
    %0 = vector.load %arg2[%c0, %c0_0, %c0_1] : memref<1x8x48xf32, #tpu.memory_space<vmem>>, vector<1x8x48xf32>
    %1 = vector.shape_cast %0 : vector<1x8x48xf32> to vector<8x48xf32>
    %2 = arith.truncf %1 : vector<8x48xf32> to vector<8x48xbf16>
    %c0_2 = arith.constant 0 : index
    %c0_3 = arith.constant 0 : index
    %3 = vector.load %arg5[%c0_2, %c0_3] : memref<48x128xbf16, #tpu.memory_space<vmem>>, vector<48x128xbf16>
    %cst = arith.constant dense<0.000000e+00> : vector<8x128xf32>
    %4 = tpu.matmul %2, %3, %cst {dimension_numbers = #tpu.dot_dimension_numbers<[1], [0], [0], [1], [0, 0, 1, 1], [], []>} : vector<8x48xbf16>, vector<48x128xbf16>, vector<8x128xf32> -> vector<8x128xf32>
    %c0_4 = arith.constant 0 : index
    %c0_5 = arith.constant 0 : index
    %5 = vector.load %arg6[%c0_4, %c0_5] : memref<1x128xf32, #tpu.memory_space<vmem>>, vector<1x128xf32>
    %6 = vector.broadcast %5 : vector<1x128xf32> to vector<8x128xf32>
    %7 = arith.addf %4, %6 : vector<8x128xf32>
    %8 = arith.truncf %7 : vector<8x128xf32> to vector<8x128xbf16>
    %c0_6 = arith.constant 0 : index
    %c0_7 = arith.constant 0 : index
    %c0_8 = arith.constant 0 : index
    %9 = vector.load %arg11[%c0_6, %c0_7, %c0_8] : memref<1x8x384xbf16, #tpu.memory_space<vmem>>, vector<1x8x128xbf16>
    %10 = vector.shape_cast %9 : vector<1x8x128xbf16> to vector<8x128xbf16>
    %11 = vector.shape_cast %8 : vector<8x128xbf16> to vector<1x8x128xbf16>
    tpu.vector_store %arg11[%c0_6, %c0_7, %c0_8], %11 {strides = array<i32>} : memref<1x8x384xbf16, #tpu.memory_space<vmem>>, vector<1x8x128xbf16>,
    %c0_9 = arith.constant 0 : index
    %c0_10 = arith.constant 0 : index
    %c0_11 = arith.constant 0 : index
    %12 = vector.load %arg3[%c0_9, %c0_10, %c0_11] : memref<1x8x48xf32, #tpu.memory_space<vmem>>, vector<1x8x48xf32>
    %13 = vector.shape_cast %12 : vector<1x8x48xf32> to vector<8x48xf32>
    %14 = arith.truncf %13 : vector<8x48xf32> to vector<8x48xbf16>
    %c0_12 = arith.constant 0 : index
    %c0_13 = arith.constant 0 : index
    %15 = vector.load %arg7[%c0_12, %c0_13] : memref<48x128xbf16, #tpu.memory_space<vmem>>, vector<48x128xbf16>
    %cst_14 = arith.constant dense<0.000000e+00> : vector<8x128xf32>
    %16 = tpu.matmul %14, %15, %cst_14 {dimension_numbers = #tpu.dot_dimension_numbers<[1], [0], [0], [1], [0, 0, 1, 1], [], []>} : vector<8x48xbf16>, vector<48x128xbf16>, vector<8x128xf32> -> vector<8x128xf32>
    %c0_15 = arith.constant 0 : index
    %c0_16 = arith.constant 0 : index
    %17 = vector.load %arg8[%c0_15, %c0_16] : memref<1x128xf32, #tpu.memory_space<vmem>>, vector<1x128xf32>
    %18 = vector.broadcast %17 : vector<1x128xf32> to vector<8x128xf32>
    %19 = arith.addf %16, %18 : vector<8x128xf32>
    %20 = arith.truncf %19 : vector<8x128xf32> to vector<8x128xbf16>
    %c0_17 = arith.constant 0 : index
    %c0_18 = arith.constant 0 : index
    %c128 = arith.constant 128 : index
    %21 = vector.load %arg11[%c0_17, %c0_18, %c128] : memref<1x8x384xbf16, #tpu.memory_space<vmem>>, vector<1x8x128xbf16>
    %22 = vector.shape_cast %21 : vector<1x8x128xbf16> to vector<8x128xbf16>
    %23 = vector.shape_cast %20 : vector<8x128xbf16> to vector<1x8x128xbf16>
    tpu.vector_store %arg11[%c0_17, %c0_18, %c128], %23 {strides = array<i32>} : memref<1x8x384xbf16, #tpu.memory_space<vmem>>, vector<1x8x128xbf16>,
    %c0_19 = arith.constant 0 : index
    %c0_20 = arith.constant 0 : index
    %c0_21 = arith.constant 0 : index
    %24 = vector.load %arg4[%c0_19, %c0_20, %c0_21] : memref<1x8x48xf32, #tpu.memory_space<vmem>>, vector<1x8x48xf32>
    %25 = vector.shape_cast %24 : vector<1x8x48xf32> to vector<8x48xf32>
    %26 = arith.truncf %25 : vector<8x48xf32> to vector<8x48xbf16>
    %c0_22 = arith.constant 0 : index
    %c0_23 = arith.constant 0 : index
    %27 = vector.load %arg9[%c0_22, %c0_23] : memref<48x128xbf16, #tpu.memory_space<vmem>>, vector<48x128xbf16>
    %cst_24 = arith.constant dense<0.000000e+00> : vector<8x128xf32>
    %28 = tpu.matmul %26, %27, %cst_24 {dimension_numbers = #tpu.dot_dimension_numbers<[1], [0], [0], [1], [0, 0, 1, 1], [], []>} : vector<8x48xbf16>, vector<48x128xbf16>, vector<8x128xf32> -> vector<8x128xf32>
    %c0_25 = arith.constant 0 : index
    %c0_26 = arith.constant 0 : index
    %29 = vector.load %arg10[%c0_25, %c0_26] : memref<1x128xf32, #tpu.memory_space<vmem>>, vector<1x128xf32>
    %30 = vector.broadcast %29 : vector<1x128xf32> to vector<8x128xf32>
    %31 = arith.addf %28, %30 : vector<8x128xf32>
    %32 = arith.truncf %31 : vector<8x128xf32> to vector<8x128xbf16>
    %c0_27 = arith.constant 0 : index
    %c0_28 = arith.constant 0 : index
    %c256 = arith.constant 256 : index
    %33 = vector.load %arg11[%c0_27, %c0_28, %c256] : memref<1x8x384xbf16, #tpu.memory_space<vmem>>, vector<1x8x128xbf16>
    %34 = vector.shape_cast %33 : vector<1x8x128xbf16> to vector<8x128xbf16>
    %35 = vector.shape_cast %32 : vector<8x128xbf16> to vector<1x8x128xbf16>
    tpu.vector_store %arg11[%c0_27, %c0_28, %c256], %35 {strides = array<i32>} : memref<1x8x384xbf16, #tpu.memory_space<vmem>>, vector<1x8x128xbf16>,
    return
  }
  func.func @transform_0(%arg0: i32, %arg1: i32) -> (i32, i32, i32) {
    %c0_i32 = arith.constant 0 : i32
    %c0_i32_0 = arith.constant 0 : i32
    return %arg0, %arg1, %c0_i32 : i32, i32, i32
  }
  func.func @transform_1(%arg0: i32, %arg1: i32) -> (i32, i32, i32) {
    %c0_i32 = arith.constant 0 : i32
    %c0_i32_0 = arith.constant 0 : i32
    return %arg0, %arg1, %c0_i32 : i32, i32, i32
  }
  func.func @transform_2(%arg0: i32, %arg1: i32) -> (i32, i32, i32) {
    %c0_i32 = arith.constant 0 : i32
    %c0_i32_0 = arith.constant 0 : i32
    return %arg0, %arg1, %c0_i32 : i32, i32, i32
  }
  func.func @transform_3(%arg0: i32, %arg1: i32) -> (i32, i32) {
    %c0_i32 = arith.constant 0 : i32
    %c0_i32_0 = arith.constant 0 : i32
    %c0_i32_1 = arith.constant 0 : i32
    return %c0_i32, %c0_i32_0 : i32, i32
  }
  func.func @transform_4(%arg0: i32, %arg1: i32) -> (i32, i32) {
    %c0_i32 = arith.constant 0 : i32
    %c0_i32_0 = arith.constant 0 : i32
    %c0_i32_1 = arith.constant 0 : i32
    return %c0_i32, %c0_i32_0 : i32, i32
  }
  func.func @transform_5(%arg0: i32, %arg1: i32) -> (i32, i32) {
    %c0_i32 = arith.constant 0 : i32
    %c0_i32_0 = arith.constant 0 : i32
    %c0_i32_1 = arith.constant 0 : i32
    return %c0_i32, %c0_i32_0 : i32, i32
  }
  func.func @transform_6(%arg0: i32, %arg1: i32) -> (i32, i32) {
    %c0_i32 = arith.constant 0 : i32
    %c0_i32_0 = arith.constant 0 : i32
    %c0_i32_1 = arith.constant 0 : i32
    return %c0_i32, %c0_i32_0 : i32, i32
  }
  func.func @transform_7(%arg0: i32, %arg1: i32) -> (i32, i32) {
    %c0_i32 = arith.constant 0 : i32
    %c0_i32_0 = arith.constant 0 : i32
    %c0_i32_1 = arith.constant 0 : i32
    return %c0_i32, %c0_i32_0 : i32, i32
  }
  func.func @transform_8(%arg0: i32, %arg1: i32) -> (i32, i32) {
    %c0_i32 = arith.constant 0 : i32
    %c0_i32_0 = arith.constant 0 : i32
    %c0_i32_1 = arith.constant 0 : i32
    return %c0_i32, %c0_i32_0 : i32, i32
  }
  func.func @transform_9(%arg0: i32, %arg1: i32) -> (i32, i32, i32) {
    %c0_i32 = arith.constant 0 : i32
    %c0_i32_0 = arith.constant 0 : i32
    return %arg0, %arg1, %c0_i32 : i32, i32, i32
  }
}

</mosaic_0001>

<llo_original>
// kernel: tpu_custom_call.1
$region0: #{tpu_custom_call.1}
  #allocation0 [shape = 'u32[]', space=smem, size = 0x4, offset = 0x4, fixed_abs, tag = 'smem constant byte address 0x4 - core index']
  #allocation1 [shape = 'u32[72,128]{1,0:T(1,128)}', space=vmem, size = 0x9000, scoped, tag = 'internal scratch']
  %s0 = inlined_call_operand.hbm [shape: f32[2,8,48], index: 0, kind: input, shape index: {}]
  %s1 = inlined_call_operand.hbm [shape: f32[2,8,48], index: 1, kind: input, shape index: {}]
  %s2 = inlined_call_operand.hbm [shape: f32[2,8,48], index: 2, kind: input, shape index: {}]
  %s3 = inlined_call_operand.hbm [shape: bf16[48,128], index: 3, kind: input, shape index: {}]
  %s4 = inlined_call_operand.vmem [shape: f32[1,128], index: 4, kind: input, shape index: {}]
  %s5 = inlined_call_operand.hbm [shape: bf16[48,128], index: 5, kind: input, shape index: {}]
  %s6 = inlined_call_operand.vmem [shape: f32[1,128], index: 6, kind: input, shape index: {}]
  %s7 = inlined_call_operand.hbm [shape: bf16[48,128], index: 7, kind: input, shape index: {}]
  %s8 = inlined_call_operand.vmem [shape: f32[1,128], index: 8, kind: input, shape index: {}]
  %s9 = inlined_call_operand.hbm [shape: bf16[2,8,384], index: 9, kind: output, shape index: {}]
  %s10 = sld [smem:[#allocation0]]
  $region93: #{tpu_custom_call.1} parent=0
    _
  %s12 = ssub.s32 1, %s10
  %s13 = scalar_select 0, %s12, %s10
  $region1: #{tpu_custom_call.1} parent=0
    #allocation2 [shape = 'u8[8192]{0}', space=vmem, size = 0x2000, scoped, tag = 'input window, operand 0']
    #allocation3 [shape = 's32[2]{0}', space=sflag, size = 0x8, scoped, tag = 'scoped memory for tpu_custom_call.1']
    #allocation4 [shape = 's32[2]{0}', space=sflag, size = 0x8, scoped, tag = 'scoped memory for tpu_custom_call.1']
    #allocation5 [shape = 'u8[8192]{0}', space=vmem, size = 0x2000, scoped, tag = 'input window, operand 1']
    #allocation6 [shape = 's32[2]{0}', space=sflag, size = 0x8, scoped, tag = 'scoped memory for tpu_custom_call.1']
    #allocation7 [shape = 'u8[8192]{0}', space=vmem, size = 0x2000, scoped, tag = 'input window, operand 2']
    #allocation8 [shape = 'u8[12288]{0}', space=vmem, size = 0x3000, scoped, tag = 'input window, operand 3, single buffered']
    #allocation9 [shape = 's32[1]{0}', space=sflag, size = 0x4, scoped, tag = 'scoped memory for tpu_custom_call.1']
    #allocation10 [shape = 'u8[12288]{0}', space=vmem, size = 0x3000, scoped, tag = 'input window, operand 5, single buffered']
    #allocation11 [shape = 'u8[12288]{0}', space=vmem, size = 0x3000, scoped, tag = 'input window, operand 7, single buffered']
    #allocation12 [shape = 's32[1]{0}', space=sflag, size = 0x4, scoped, tag = 'scoped memory for tpu_custom_call.1']
    #allocation13 [shape = 'u8[12288]{0}', space=vmem, size = 0x3000, scoped, tag = 'output window, operand 0']
    %14 = vsyncpa [#allocation3], 0
    %s15 = scalar_lea.sflag [#allocation3], 1
    %16 = vsyncpa %s15, 0
    %17 = vsyncpa [#allocation6], 0
    %s18 = scalar_lea.sflag [#allocation6], 1
    %19 = vsyncpa %s18, 0
    %20 = vsyncpa [#allocation9], 0
    %21 = vsyncpa [#allocation12], 0
    %22 = vsyncpa [#allocation4], 0
    %s23 = scalar_lea.sflag [#allocation4], 1
    %24 = vsyncpa %s23, 0
    loop: start=0, step=1, limit=4
    $region2: #{tpu_custom_call.1} parent=1 // loop_pre_header
      _
    $region3: #{tpu_custom_call.1} parent=1 // loop_header
      %s26 = sphi 0, %s30
      %p27 = scmp.ge.s32.totalorder %s26, 4
      %s33 = sphi 0, %s45
      %s34 = sphi 0, %s41
      %s35 = sphi 0, %s33
      %s36 = sphi 0, %s34
      %s37 = sphi 0, %s35
      %s38 = sphi 0, %s36
      %s50 = sphi 0, %s52
      %s53 = sphi 0, %s50
      %s54 = sphi 0, %s53
      %s70 = sphi 0, %s54
      %s78 = sphi 0, %s80
      %s81 = sphi 0, %s78
      %s82 = sphi 0, %s81
      %s98 = sphi 0, %s82
      %s106 = sphi 0, %s108
      %s109 = sphi 0, %s106
      %s110 = sphi 0, %s109
      %s126 = sphi 0, %s110
      %s130 = sphi 0, %s130
      %s132 = sphi 0, %s130
      %s133 = sphi 0, %s132
      %s147 = sphi 0, %s133
      %s151 = sphi 0, %s151
      %s153 = sphi 0, %s151
      %s154 = sphi 0, %s153
      %s168 = sphi 0, %s154
      %s172 = sphi 0, %s172
      %s174 = sphi 0, %s172
      %s175 = sphi 0, %s174
      %s189 = sphi 0, %s175
      %s193 = sphi 0, %s193
      %s195 = sphi 0, %s193
      %s196 = sphi 0, %s195
      %s210 = sphi 0, %s196
      %s214 = sphi 0, %s214
      %s216 = sphi 0, %s214
      %s217 = sphi 0, %s216
      %s231 = sphi 0, %s217
      %s235 = sphi 0, %s235
      %s237 = sphi 0, %s235
      %s238 = sphi 0, %s237
      %s252 = sphi 0, %s238
      %s260 = sphi 0, %s262
      %s263 = sphi 0, %s260
      %s264 = sphi 0, %s263
      %s280 = sphi 0, %s264
    $region4: #{tpu_custom_call.1} parent=1 // loop_header_branch
      %29 = sbr.rel (%p27) target = $region8
    $region5: #{tpu_custom_call.1} parent=1 // loop_body
      %s31 = ssub.s32 %s26, 1
      %s32 = ssub.s32 %s26, 2
      %s39 = sadd.s32 1, %s34
      %p40 = scmp.ge.s32.totalorder %s39, 1
      %s41 = scalar_select %p40, 0, %s39
      %s42 = sadd.s32 1, %s33
      %s43 = scalar_select %p40, %s42, %s33
      %p44 = scmp.ge.s32.totalorder %s43, 2
      %s45 = scalar_select %p44, 0, %s43
      %s46 = ssub.s32 %s33, %s45
      %s47 = ssub.s32 %s34, %s41
      %s48 = sor.u32 %s46, %s47
      %p49 = scmp.eq.s32.totalorder %s48, 0
      %s51 = sadd.s32 %s50, 1
      %s52 = scalar_select %p49, %s50, %s51
      %p55 = pneg %p49
      %p56 = scmp.eq.s32.totalorder %s26, 1
      %p57 = por %p55, %p56
      %p58 = scmp.ne.s32.totalorder %s50, %s53
      %p59 = scmp.eq.s32.totalorder %s26, 0
      %p60 = por %p58, %p59
      %p61 = scmp.ne.s32.totalorder %s50, %s53
      %p62 = scmp.eq.s32.totalorder %s31, 1
      %p63 = por %p61, %p62
      %p64 = scmp.ne.s32.totalorder %s53, %s54
      %p65 = scmp.eq.s32.totalorder %s31, 0
      %p66 = por %p64, %p65
      %p67 = scmp.ne.s32.totalorder %s53, %s54
      %p68 = scmp.eq.s32.totalorder %s32, 1
      %p69 = por %p67, %p68
      %p71 = scmp.ne.s32.totalorder %s54, %s70
      %p72 = scmp.eq.s32.totalorder %s32, 0
      %p73 = por %p71, %p72
      %s74 = ssub.s32 %s33, %s45
      %s75 = ssub.s32 %s34, %s41
      %s76 = sor.u32 %s74, %s75
      %p77 = scmp.eq.s32.totalorder %s76, 0
      %s79 = sadd.s32 %s78, 1
      %s80 = scalar_select %p77, %s78, %s79
      %p83 = pneg %p77
      %p84 = scmp.eq.s32.totalorder %s26, 1
      %p85 = por %p83, %p84
      %p86 = scmp.ne.s32.totalorder %s78, %s81
      %p87 = scmp.eq.s32.totalorder %s26, 0
      %p88 = por %p86, %p87
      %p89 = scmp.ne.s32.totalorder %s78, %s81
      %p90 = scmp.eq.s32.totalorder %s31, 1
      %p91 = por %p89, %p90
      %p92 = scmp.ne.s32.totalorder %s81, %s82
      %p93 = scmp.eq.s32.totalorder %s31, 0
      %p94 = por %p92, %p93
      %p95 = scmp.ne.s32.totalorder %s81, %s82
      %p96 = scmp.eq.s32.totalorder %s32, 1
      %p97 = por %p95, %p96
      %p99 = scmp.ne.s32.totalorder %s82, %s98
      %p100 = scmp.eq.s32.totalorder %s32, 0
      %p101 = por %p99, %p100
      %s102 = ssub.s32 %s33, %s45
      %s103 = ssub.s32 %s34, %s41
      %s104 = sor.u32 %s102, %s103
      %p105 = scmp.eq.s32.totalorder %s104, 0
      %s107 = sadd.s32 %s106, 1
      %s108 = scalar_select %p105, %s106, %s107
      %p111 = pneg %p105
      %p112 = scmp.eq.s32.totalorder %s26, 1
      %p113 = por %p111, %p112
      %p114 = scmp.ne.s32.totalorder %s106, %s109
      %p115 = scmp.eq.s32.totalorder %s26, 0
      %p116 = por %p114, %p115
      %p117 = scmp.ne.s32.totalorder %s106, %s109
      %p118 = scmp.eq.s32.totalorder %s31, 1
      %p119 = por %p117, %p118
      %p120 = scmp.ne.s32.totalorder %s109, %s110
      %p121 = scmp.eq.s32.totalorder %s31, 0
      %p122 = por %p120, %p121
      %p123 = scmp.ne.s32.totalorder %s109, %s110
      %p124 = scmp.eq.s32.totalorder %s32, 1
      %p125 = por %p123, %p124
      %p127 = scmp.ne.s32.totalorder %s110, %s126
      %p128 = scmp.eq.s32.totalorder %s32, 0
      %p129 = por %p127, %p128
      %s131 = sadd.s32 %s130, 1
      %p134 = scmp.eq.s32.totalorder %s26, 1
      %p135 = scmp.ne.s32.totalorder %s130, %s132
      %p136 = scmp.eq.s32.totalorder %s26, 0
      %p137 = por %p135, %p136
      %p138 = scmp.ne.s32.totalorder %s130, %s132
      %p139 = scmp.eq.s32.totalorder %s31, 1
      %p140 = por %p138, %p139
      %p141 = scmp.ne.s32.totalorder %s132, %s133
      %p142 = scmp.eq.s32.totalorder %s31, 0
      %p143 = por %p141, %p142
      %p144 = scmp.ne.s32.totalorder %s132, %s133
      %p145 = scmp.eq.s32.totalorder %s32, 1
      %p146 = por %p144, %p145
      %p148 = scmp.ne.s32.totalorder %s133, %s147
      %p149 = scmp.eq.s32.totalorder %s32, 0
      %p150 = por %p148, %p149
      %s152 = sadd.s32 %s151, 1
      %p155 = scmp.eq.s32.totalorder %s26, 1
      %p156 = scmp.ne.s32.totalorder %s151, %s153
      %p157 = scmp.eq.s32.totalorder %s26, 0
      %p158 = por %p156, %p157
      %p159 = scmp.ne.s32.totalorder %s151, %s153
      %p160 = scmp.eq.s32.totalorder %s31, 1
      %p161 = por %p159, %p160
      %p162 = scmp.ne.s32.totalorder %s153, %s154
      %p163 = scmp.eq.s32.totalorder %s31, 0
      %p164 = por %p162, %p163
      %p165 = scmp.ne.s32.totalorder %s153, %s154
      %p166 = scmp.eq.s32.totalorder %s32, 1
      %p167 = por %p165, %p166
      %p169 = scmp.ne.s32.totalorder %s154, %s168
      %p170 = scmp.eq.s32.totalorder %s32, 0
      %p171 = por %p169, %p170
      %s173 = sadd.s32 %s172, 1
      %p176 = scmp.eq.s32.totalorder %s26, 1
      %p177 = scmp.ne.s32.totalorder %s172, %s174
      %p178 = scmp.eq.s32.totalorder %s26, 0
      %p179 = por %p177, %p178
      %p180 = scmp.ne.s32.totalorder %s172, %s174
      %p181 = scmp.eq.s32.totalorder %s31, 1
      %p182 = por %p180, %p181
      %p183 = scmp.ne.s32.totalorder %s174, %s175
      %p184 = scmp.eq.s32.totalorder %s31, 0
      %p185 = por %p183, %p184
      %p186 = scmp.ne.s32.totalorder %s174, %s175
      %p187 = scmp.eq.s32.totalorder %s32, 1
      %p188 = por %p186, %p187
      %p190 = scmp.ne.s32.totalorder %s175, %s189
      %p191 = scmp.eq.s32.totalorder %s32, 0
      %p192 = por %p190, %p191
      %s194 = sadd.s32 %s193, 1
      %p197 = scmp.eq.s32.totalorder %s26, 1
      %p198 = scmp.ne.s32.totalorder %s193, %s195
      %p199 = scmp.eq.s32.totalorder %s26, 0
      %p200 = por %p198, %p199
      %p201 = scmp.ne.s32.totalorder %s193, %s195
      %p202 = scmp.eq.s32.totalorder %s31, 1
      %p203 = por %p201, %p202
      %p204 = scmp.ne.s32.totalorder %s195, %s196
      %p205 = scmp.eq.s32.totalorder %s31, 0
      %p206 = por %p204, %p205
      %p207 = scmp.ne.s32.totalorder %s195, %s196
      %p208 = scmp.eq.s32.totalorder %s32, 1
      %p209 = por %p207, %p208
      %p211 = scmp.ne.s32.totalorder %s196, %s210
      %p212 = scmp.eq.s32.totalorder %s32, 0
      %p213 = por %p211, %p212
      %s215 = sadd.s32 %s214, 1
      %p218 = scmp.eq.s32.totalorder %s26, 1
      %p219 = scmp.ne.s32.totalorder %s214, %s216
      %p220 = scmp.eq.s32.totalorder %s26, 0
      %p221 = por %p219, %p220
      %p222 = scmp.ne.s32.totalorder %s214, %s216
      %p223 = scmp.eq.s32.totalorder %s31, 1
      %p224 = por %p222, %p223
      %p225 = scmp.ne.s32.totalorder %s216, %s217
      %p226 = scmp.eq.s32.totalorder %s31, 0
      %p227 = por %p225, %p226
      %p228 = scmp.ne.s32.totalorder %s216, %s217
      %p229 = scmp.eq.s32.totalorder %s32, 1
      %p230 = por %p228, %p229
      %p232 = scmp.ne.s32.totalorder %s217, %s231
      %p233 = scmp.eq.s32.totalorder %s32, 0
      %p234 = por %p232, %p233
      %s236 = sadd.s32 %s235, 1
      %p239 = scmp.eq.s32.totalorder %s26, 1
      %p240 = scmp.ne.s32.totalorder %s235, %s237
      %p241 = scmp.eq.s32.totalorder %s26, 0
      %p242 = por %p240, %p241
      %p243 = scmp.ne.s32.totalorder %s235, %s237
      %p244 = scmp.eq.s32.totalorder %s31, 1
      %p245 = por %p243, %p244
      %p246 = scmp.ne.s32.totalorder %s237, %s238
      %p247 = scmp.eq.s32.totalorder %s31, 0
      %p248 = por %p246, %p247
      %p249 = scmp.ne.s32.totalorder %s237, %s238
      %p250 = scmp.eq.s32.totalorder %s32, 1
      %p251 = por %p249, %p250
      %p253 = scmp.ne.s32.totalorder %s238, %s252
      %p254 = scmp.eq.s32.totalorder %s32, 0
      %p255 = por %p253, %p254
      %s256 = ssub.s32 %s33, %s45
      %s257 = ssub.s32 %s34, %s41
      %s258 = sor.u32 %s256, %s257
      %p259 = scmp.eq.s32.totalorder %s258, 0
      %s261 = sadd.s32 %s260, 1
      %s262 = scalar_select %p259, %s260, %s261
      %p265 = pneg %p259
      %p266 = scmp.eq.s32.totalorder %s26, 1
      %p267 = por %p265, %p266
      %p268 = scmp.ne.s32.totalorder %s260, %s263
      %p269 = scmp.eq.s32.totalorder %s26, 0
      %p270 = por %p268, %p269
      %p271 = scmp.ne.s32.totalorder %s260, %s263
      %p272 = scmp.eq.s32.totalorder %s31, 1
      %p273 = por %p271, %p272
      %p274 = scmp.ne.s32.totalorder %s263, %s264
      %p275 = scmp.eq.s32.totalorder %s31, 0
      %p276 = por %p274, %p275
      %p277 = scmp.ne.s32.totalorder %s263, %s264
      %p278 = scmp.eq.s32.totalorder %s32, 1
      %p279 = por %p277, %p278
      %p281 = scmp.ne.s32.totalorder %s264, %s280
      %p282 = scmp.eq.s32.totalorder %s32, 0
      %p283 = por %p281, %p282
      %p284 = scmp.le.s32.totalorder 1, %s26
      %p285 = scmp.lt.s32.totalorder %s26, 3
      %p286 = pnand %p284, %p285
      %p287 = pneg %p286
      // Predicated region
      $region9: #{tpu_custom_call.1} parent=5 // pred_check
        _
      $region10: #{tpu_custom_call.1} parent=5 // pred_check_branch
        %289 = sbr.rel (%p286) target = $region12
      $region11: #{tpu_custom_call.1} parent=5 // pred_region
        %s290 = ssub.s32 %s26, 1
        // Predicated region
        $region13: #{tpu_custom_call.1} parent=11 // pred_check
          %p291 = pneg %p143
        $region14: #{tpu_custom_call.1} parent=11 // pred_check_branch
          %293 = sbr.rel (%p291) target = $region16
        $region15: #{tpu_custom_call.1} parent=11 // pred_region
          %295 = vsyncadd [#allocation9], 0
          %s296 = sshll.u32 %s3, 4
          %s297 = int_to_ptr.hbm [resolvable:$true] %s296
          %s298 = sshll.u32 [#allocation8], 4
          %s299 = int_to_ptr.vmem [resolvable:$true] %s298
          %304 = dma.hbm_to_vmem [thread:$0]  %s297, 384, %s299, [#allocation9], 64, 64, 4
        $region16: #{tpu_custom_call.1} parent=11 // pred_fallthru
          _
        // Predicated region
        $region17: #{tpu_custom_call.1} parent=11 // pred_check
          %p305 = pneg %p164
        $region18: #{tpu_custom_call.1} parent=11 // pred_check_branch
          %307 = sbr.rel (%p305) target = $region20
        $region19: #{tpu_custom_call.1} parent=11 // pred_region
          _
        $region20: #{tpu_custom_call.1} parent=11 // pred_fallthru
          _
        // Predicated region
        $region21: #{tpu_custom_call.1} parent=11 // pred_check
          %p308 = pneg %p185
        $region22: #{tpu_custom_call.1} parent=11 // pred_check_branch
          %310 = sbr.rel (%p308) target = $region24
        $region23: #{tpu_custom_call.1} parent=11 // pred_region
          %312 = vsyncadd [#allocation9], 0
          %s313 = sshll.u32 %s5, 4
          %s314 = int_to_ptr.hbm [resolvable:$true] %s313
          %s315 = sshll.u32 [#allocation10], 4
          %s316 = int_to_ptr.vmem [resolvable:$true] %s315
          %321 = dma.hbm_to_vmem [thread:$0]  %s314, 384, %s316, [#allocation9], 64, 64, 4
        $region24: #{tpu_custom_call.1} parent=11 // pred_fallthru
          _
        // Predicated region
        $region25: #{tpu_custom_call.1} parent=11 // pred_check
          %p322 = pneg %p206
        $region26: #{tpu_custom_call.1} parent=11 // pred_check_branch
          %324 = sbr.rel (%p322) target = $region28
        $region27: #{tpu_custom_call.1} parent=11 // pred_region
          _
        $region28: #{tpu_custom_call.1} parent=11 // pred_fallthru
          _
        // Predicated region
        $region29: #{tpu_custom_call.1} parent=11 // pred_check
          %p325 = pneg %p227
        $region30: #{tpu_custom_call.1} parent=11 // pred_check_branch
          %327 = sbr.rel (%p325) target = $region32
        $region31: #{tpu_custom_call.1} parent=11 // pred_region
          %329 = vsyncadd [#allocation12], 0
          %s330 = sshll.u32 %s7, 4
          %s331 = int_to_ptr.hbm [resolvable:$true] %s330
          %s332 = sshll.u32 [#allocation11], 4
          %s333 = int_to_ptr.vmem [resolvable:$true] %s332
          %338 = dma.hbm_to_vmem [thread:$0]  %s331, 384, %s333, [#allocation12], 64, 64, 4
        $region32: #{tpu_custom_call.1} parent=11 // pred_fallthru
          _
        // Predicated region
        $region33: #{tpu_custom_call.1} parent=11 // pred_check
          %p339 = pneg %p248
        $region34: #{tpu_custom_call.1} parent=11 // pred_check_branch
          %341 = sbr.rel (%p339) target = $region36
        $region35: #{tpu_custom_call.1} parent=11 // pred_region
          _
        $region36: #{tpu_custom_call.1} parent=11 // pred_fallthru
          _
      $region12: #{tpu_custom_call.1} parent=5 // pred_fallthru
        _
      %p342 = scmp.lt.s32.totalorder %s26, 2
      // Predicated region
      $region37: #{tpu_custom_call.1} parent=5 // pred_check
        %p343 = pneg %p342
      $region38: #{tpu_custom_call.1} parent=5 // pred_check_branch
        %345 = sbr.rel (%p343) target = $region40
      $region39: #{tpu_custom_call.1} parent=5 // pred_region
        // Predicated region
        $region41: #{tpu_custom_call.1} parent=39 // pred_check
          %p346 = pneg %p60
        $region42: #{tpu_custom_call.1} parent=39 // pred_check_branch
          %348 = sbr.rel (%p346) target = $region44
        $region43: #{tpu_custom_call.1} parent=39 // pred_region
          %s349 = sand.u32 %s50, 1
          %s350 = scalar_lea.sflag [#allocation3], %s349
          %s351 = sand.u32 %s50, 1
          %s352 = smul.addr %s351, 8
          %s353 = scalar_lea.vmem [#allocation2], %s352
          %355 = vsyncadd %s350, 0
          %s356 = sadd.s32 %s34, %s33
          %s357 = smul.addr %s356, 8
          %s358 = scalar_lea.hbm %s0, %s357
          %s360 = sshll.u32 %s358, 4
          %s361 = int_to_ptr.hbm [resolvable:$true] %s360
          %s362 = sshll.u32 %s353, 4
          %s363 = int_to_ptr.vmem [resolvable:$true] %s362
          %365 = dma.hbm_to_vmem [thread:$0]  %s361, 128, %s363, %s350
        $region44: #{tpu_custom_call.1} parent=39 // pred_fallthru
          _
        // Predicated region
        $region45: #{tpu_custom_call.1} parent=39 // pred_check
          %p366 = pneg %p88
        $region46: #{tpu_custom_call.1} parent=39 // pred_check_branch
          %368 = sbr.rel (%p366) target = $region48
        $region47: #{tpu_custom_call.1} parent=39 // pred_region
          %s369 = sand.u32 %s26, 1
          %s370 = scalar_lea.sflag [#allocation6], %s369
          %s371 = sand.u32 %s78, 1
          %s372 = smul.addr %s371, 8
          %s373 = scalar_lea.vmem [#allocation5], %s372
          %375 = vsyncadd %s370, 0
          %s376 = sadd.s32 %s34, %s33
          %s377 = smul.addr %s376, 8
          %s378 = scalar_lea.hbm %s1, %s377
          %s380 = sshll.u32 %s378, 4
          %s381 = int_to_ptr.hbm [resolvable:$true] %s380
          %s382 = sshll.u32 %s373, 4
          %s383 = int_to_ptr.vmem [resolvable:$true] %s382
          %385 = dma.hbm_to_vmem [thread:$0]  %s381, 128, %s383, %s370
        $region48: #{tpu_custom_call.1} parent=39 // pred_fallthru
          _
        // Predicated region
        $region49: #{tpu_custom_call.1} parent=39 // pred_check
          %p386 = pneg %p116
        $region50: #{tpu_custom_call.1} parent=39 // pred_check_branch
          %388 = sbr.rel (%p386) target = $region52
        $region51: #{tpu_custom_call.1} parent=39 // pred_region
          %s389 = sand.u32 %s26, 1
          %s390 = scalar_lea.sflag [#allocation6], %s389
          %s391 = sand.u32 %s106, 1
          %s392 = smul.addr %s391, 8
          %s393 = scalar_lea.vmem [#allocation7], %s392
          %395 = vsyncadd %s390, 0
          %s396 = sadd.s32 %s34, %s33
          %s397 = smul.addr %s396, 8
          %s398 = scalar_lea.hbm %s2, %s397
          %s400 = sshll.u32 %s398, 4
          %s401 = int_to_ptr.hbm [resolvable:$true] %s400
          %s402 = sshll.u32 %s393, 4
          %s403 = int_to_ptr.vmem [resolvable:$true] %s402
          %405 = dma.hbm_to_vmem [thread:$0]  %s401, 128, %s403, %s390
        $region52: #{tpu_custom_call.1} parent=39 // pred_fallthru
          _
      $region40: #{tpu_custom_call.1} parent=5 // pred_fallthru
        _
      %p406 = scmp.le.s32.totalorder 1, %s26
      %p407 = scmp.lt.s32.totalorder %s26, 3
      %p408 = pnand %p406, %p407
      %p409 = pneg %p408
      // Predicated region
      $region53: #{tpu_custom_call.1} parent=5 // pred_check
        _
      $region54: #{tpu_custom_call.1} parent=5 // pred_check_branch
        %411 = sbr.rel (%p408) target = $region56
      $region55: #{tpu_custom_call.1} parent=5 // pred_region
        %s412 = ssub.s32 %s26, 1
        %s413 = sand.u32 %s53, 1
        %s414 = scalar_lea.sflag [#allocation3], %s413
        %s415 = sand.u32 %s53, 1
        %s416 = smul.addr %s415, 8
        %s417 = scalar_lea.vmem [#allocation2], %s416
        // Predicated region
        $region57: #{tpu_custom_call.1} parent=55 // pred_check
          %p418 = pneg %p66
        $region58: #{tpu_custom_call.1} parent=55 // pred_check_branch
          %420 = sbr.rel (%p418) target = $region60
        $region59: #{tpu_custom_call.1} parent=55 // pred_region
          %422 = dma.done %s414, 128
        $region60: #{tpu_custom_call.1} parent=55 // pred_fallthru
          _
        %s423 = sand.u32 %s31, 1
        %s424 = scalar_lea.sflag [#allocation6], %s423
        %s425 = sand.u32 %s81, 1
        %s426 = smul.addr %s425, 8
        %s427 = scalar_lea.vmem [#allocation5], %s426
        // Predicated region
        $region61: #{tpu_custom_call.1} parent=55 // pred_check
          %p428 = pneg %p94
        $region62: #{tpu_custom_call.1} parent=55 // pred_check_branch
          %430 = sbr.rel (%p428) target = $region64
        $region63: #{tpu_custom_call.1} parent=55 // pred_region
          %432 = dma.done %s424, 128
        $region64: #{tpu_custom_call.1} parent=55 // pred_fallthru
          _
        %s433 = sand.u32 %s31, 1
        %s434 = scalar_lea.sflag [#allocation6], %s433
        %s435 = sand.u32 %s109, 1
        %s436 = smul.addr %s435, 8
        %s437 = scalar_lea.vmem [#allocation7], %s436
        // Predicated region
        $region65: #{tpu_custom_call.1} parent=55 // pred_check
          %p438 = pneg %p122
        $region66: #{tpu_custom_call.1} parent=55 // pred_check_branch
          %440 = sbr.rel (%p438) target = $region68
        $region67: #{tpu_custom_call.1} parent=55 // pred_region
          %442 = dma.done %s434, 128
        $region68: #{tpu_custom_call.1} parent=55 // pred_fallthru
          _
        // Predicated region
        $region69: #{tpu_custom_call.1} parent=55 // pred_check
          %p443 = pneg %p143
        $region70: #{tpu_custom_call.1} parent=55 // pred_check_branch
          %445 = sbr.rel (%p443) target = $region72
        $region71: #{tpu_custom_call.1} parent=55 // pred_region
          %447 = dma.done [#allocation9], 384
        $region72: #{tpu_custom_call.1} parent=55 // pred_fallthru
          _
        // Predicated region
        $region73: #{tpu_custom_call.1} parent=55 // pred_check
          %p448 = pneg %p185
        $region74: #{tpu_custom_call.1} parent=55 // pred_check_branch
          %450 = sbr.rel (%p448) target = $region76
        $region75: #{tpu_custom_call.1} parent=55 // pred_region
          %452 = dma.done [#allocation9], 384
        $region76: #{tpu_custom_call.1} parent=55 // pred_fallthru
          _
        // Predicated region
        $region77: #{tpu_custom_call.1} parent=55 // pred_check
          %p453 = pneg %p227
        $region78: #{tpu_custom_call.1} parent=55 // pred_check_branch
          %455 = sbr.rel (%p453) target = $region80
        $region79: #{tpu_custom_call.1} parent=55 // pred_region
          %457 = dma.done [#allocation12], 384
        $region80: #{tpu_custom_call.1} parent=55 // pred_fallthru
          _
        %s458 = sand.u32 %s53, 1
        %s459 = scalar_lea.sflag [#allocation3], %s458
        %s460 = sand.u32 %s53, 1
        %s461 = smul.addr %s460, 8
        %s462 = scalar_lea.vmem [#allocation2], %s461
        %p463 = pneg %p66
        %p464 = pneg %p63
        %s465 = sand.u32 %s31, 1
        %s466 = scalar_lea.sflag [#allocation6], %s465
        %s467 = sand.u32 %s81, 1
        %s468 = smul.addr %s467, 8
        %s469 = scalar_lea.vmem [#allocation5], %s468
        %p470 = pneg %p94
        %p471 = pneg %p91
        %s472 = sand.u32 %s31, 1
        %s473 = scalar_lea.sflag [#allocation6], %s472
        %s474 = sand.u32 %s109, 1
        %s475 = smul.addr %s474, 8
        %s476 = scalar_lea.vmem [#allocation7], %s475
        %p477 = pneg %p122
        %p478 = pneg %p119
        %p479 = pneg %p143
        %p480 = pneg %p140
        %p481 = pneg %p164
        %p482 = pneg %p161
        %p483 = pneg %p185
        %p484 = pneg %p182
        %p485 = pneg %p206
        %p486 = pneg %p203
        %p487 = pneg %p227
        %p488 = pneg %p224
        %p489 = pneg %p248
        %p490 = pneg %p245
        %p491 = pneg %p276
        %p492 = pneg %p273
        %s493 = sand.u32 %s263, 1
        %s494 = scalar_lea.sflag [#allocation4], %s493
        %s495 = sand.u32 %s263, 1
        %s496 = smul.addr %s495, 12
        %s497 = scalar_lea.vmem [#allocation13], %s496
        %v499 = vld [vmem:[%s417] sm:$0xff]
        %v500 = vpack.c.bf16 %v499, %v499
        %v501 = vld [vmem:[#allocation8] sm:$0xf]
        %v502 = vld [vmem:[#allocation8 + $0x4] sm:$0xf]
        %v503 = vld [vmem:[#allocation8 + $0x8] sm:$0xf]
        %v504 = vld [vmem:[#allocation8 + $0xc] sm:$0xf]
        %v505 = vld [vmem:[#allocation8 + $0x10] sm:$0xf]
        %v506 = vld [vmem:[#allocation8 + $0x14] sm:$0xf]
        %v507 = vld [vmem:[%s4] sm:$0x1]
        %v509 = vperm.slane %v507, 0
        %v517 = vunpack.c.l.b16 %v501
        %v518 = vunpack.c.l.b16 %v502
        %v519 = vunpack.c.l.b16 %v503
        %v520 = vunpack.c.l.b16 %v504
        %v521 = vunpack.c.l.b16 %v505
        %v522 = vunpack.c.l.b16 %v506
        %v523 = vpack.c.b16 %v518, %v517
        %v524 = vpack.c.b16 %v520, %v519
        %v525 = vpack.c.b16 %v522, %v521
        %vm529 = vcmask 392192
        %v531 = vsel %vm529, %v500, 0
        %533 = vmatpush.bf16.msra.mxu0 0
        %534 = vmatpush.bf16.msra.mxu0 0
        %535 = vmatpush.bf16.msra.mxu0 0
        %536 = vmatpush.bf16.msra.mxu0 0
        %537 = vmatpush.bf16.msra.mxu0 0
        %538 = vmatpush.bf16.msra.mxu0 %v525
        %539 = vmatpush.bf16.msra.mxu0 %v524
        %540 = vmatpush.bf16.msra.mxu0 %v523
        %541 = vmatmul.bf16.gmra.mxu0 %v531
        %v542 = vpop.f32.mrf.mxu0
        %v543 = vadd.f32 %v509, %v542
        %v544 = vpop.f32.mrf.mxu0
        %545 = vdwg.mxu0
        %v546 = vpack.c.bf16 %v543, %v543
        %547 = vst [vmem:[%s497] sm:$0xf] %v546
        %v548 = vld [vmem:[%s427] sm:$0xff]
        %v549 = vpack.c.bf16 %v548, %v548
        %v550 = vld [vmem:[#allocation10] sm:$0xf]
        %v551 = vld [vmem:[#allocation10 + $0x4] sm:$0xf]
        %v552 = vld [vmem:[#allocation10 + $0x8] sm:$0xf]
        %v553 = vld [vmem:[#allocation10 + $0xc] sm:$0xf]
        %v554 = vld [vmem:[#allocation10 + $0x10] sm:$0xf]
        %v555 = vld [vmem:[#allocation10 + $0x14] sm:$0xf]
        %v556 = vld [vmem:[%s6] sm:$0x1]
        %v558 = vperm.slane %v556, 0
        %v566 = vunpack.c.l.b16 %v550
        %v567 = vunpack.c.l.b16 %v551
        %v568 = vunpack.c.l.b16 %v552
        %v569 = vunpack.c.l.b16 %v553
        %v570 = vunpack.c.l.b16 %v554
        %v571 = vunpack.c.l.b16 %v555
        %v572 = vpack.c.b16 %v567, %v566
        %v573 = vpack.c.b16 %v569, %v568
        %v574 = vpack.c.b16 %v571, %v570
        %v579 = vsel %vm529, %v549, 0
        %581 = vmatpush.bf16.msra.mxu0 0
        %582 = vmatpush.bf16.msra.mxu0 0
        %583 = vmatpush.bf16.msra.mxu0 0
        %584 = vmatpush.bf16.msra.mxu0 0
        %585 = vmatpush.bf16.msra.mxu0 0
        %586 = vmatpush.bf16.msra.mxu0 %v574
        %587 = vmatpush.bf16.msra.mxu0 %v573
        %588 = vmatpush.bf16.msra.mxu0 %v572
        %589 = vmatmul.bf16.gmra.mxu0 %v579
        %v590 = vpop.f32.mrf.mxu0
        %v591 = vadd.f32 %v558, %v590
        %v592 = vpop.f32.mrf.mxu0
        %593 = vdwg.mxu0
        %v594 = vpack.c.bf16 %v591, %v591
        %595 = vst [vmem:[%s497 + $0x4] sm:$0xf] %v594
        %v596 = vld [vmem:[%s437] sm:$0xff]
        %v597 = vpack.c.bf16 %v596, %v596
        %v598 = vld [vmem:[#allocation11] sm:$0xf]
        %v599 = vld [vmem:[#allocation11 + $0x4] sm:$0xf]
        %v600 = vld [vmem:[#allocation11 + $0x8] sm:$0xf]
        %v601 = vld [vmem:[#allocation11 + $0xc] sm:$0xf]
        %v602 = vld [vmem:[#allocation11 + $0x10] sm:$0xf]
        %v603 = vld [vmem:[#allocation11 + $0x14] sm:$0xf]
        %v604 = vld [vmem:[%s8] sm:$0x1]
        %v606 = vperm.slane %v604, 0
        %v614 = vunpack.c.l.b16 %v598
        %v615 = vunpack.c.l.b16 %v599
        %v616 = vunpack.c.l.b16 %v600
        %v617 = vunpack.c.l.b16 %v601
        %v618 = vunpack.c.l.b16 %v602
        %v619 = vunpack.c.l.b16 %v603
        %v620 = vpack.c.b16 %v615, %v614
        %v621 = vpack.c.b16 %v617, %v616
        %v622 = vpack.c.b16 %v619, %v618
        %v627 = vsel %vm529, %v597, 0
        %629 = vmatpush.bf16.msra.mxu0 0
        %630 = vmatpush.bf16.msra.mxu0 0
        %631 = vmatpush.bf16.msra.mxu0 0
        %632 = vmatpush.bf16.msra.mxu0 0
        %633 = vmatpush.bf16.msra.mxu0 0
        %634 = vmatpush.bf16.msra.mxu0 %v622
        %635 = vmatpush.bf16.msra.mxu0 %v621
        %636 = vmatpush.bf16.msra.mxu0 %v620
        %637 = vmatmul.bf16.gmra.mxu0 %v627
        %v638 = vpop.f32.mrf.mxu0
        %v639 = vadd.f32 %v606, %v638
        %v640 = vpop.f32.mrf.mxu0
        %641 = vdwg.mxu0
        %v642 = vpack.c.bf16 %v639, %v639
        %643 = vst [vmem:[%s497 + $0x8] sm:$0xf] %v642
        %s644 = sand.u32 %s263, 1
        %s645 = scalar_lea.sflag [#allocation4], %s644
        %s646 = sand.u32 %s263, 1
        %s647 = smul.addr %s646, 12
        %s648 = scalar_lea.vmem [#allocation13], %s647
        // Predicated region
        $region81: #{tpu_custom_call.1} parent=55 // pred_check
          %p649 = pneg %p273
        $region82: #{tpu_custom_call.1} parent=55 // pred_check_branch
          %651 = sbr.rel (%p649) target = $region84
        $region83: #{tpu_custom_call.1} parent=55 // pred_region
          %653 = vsyncadd %s645, 0
          %s654 = smul.addr %s36, 3
          %s655 = smul.addr %s35, 3
          %s656 = sadd.s32 %s654, %s655
          %s657 = smul.addr %s656, 4
          %s658 = scalar_lea.hbm %s9, %s657
          %s660 = sshll.u32 %s648, 4
          %s661 = int_to_ptr.vmem [resolvable:$true] %s660
          %s662 = sshll.u32 %s658, 4
          %s663 = int_to_ptr.hbm [resolvable:$true] %s662
          %665 = dma.vmem_to_hbm [thread:$0]  %s661, 192, %s663, %s645
        $region84: #{tpu_custom_call.1} parent=55 // pred_fallthru
          _
      $region56: #{tpu_custom_call.1} parent=5 // pred_fallthru
        _
      %p666 = scmp.le.s32.totalorder 2, %s26
      // Predicated region
      $region85: #{tpu_custom_call.1} parent=5 // pred_check
        %p667 = pneg %p666
      $region86: #{tpu_custom_call.1} parent=5 // pred_check_branch
        %669 = sbr.rel (%p667) target = $region88
      $region87: #{tpu_custom_call.1} parent=5 // pred_region
        %s670 = ssub.s32 %s26, 2
        // Predicated region
        $region89: #{tpu_custom_call.1} parent=87 // pred_check
          %p671 = pneg %p279
        $region90: #{tpu_custom_call.1} parent=87 // pred_check_branch
          %673 = sbr.rel (%p671) target = $region92
        $region91: #{tpu_custom_call.1} parent=87 // pred_region
          %s674 = sand.u32 %s264, 1
          %s675 = scalar_lea.sflag [#allocation4], %s674
          %s676 = sand.u32 %s264, 1
          %s677 = smul.addr %s676, 12
          %s678 = scalar_lea.vmem [#allocation13], %s677
          %680 = dma.done %s675, 192
        $region92: #{tpu_custom_call.1} parent=87 // pred_fallthru
          _
      $region88: #{tpu_custom_call.1} parent=5 // pred_fallthru
        _
    $region6: #{tpu_custom_call.1} parent=1 // loop_footer
      %s30 = sadd.s32 1, %s26
    $region7: #{tpu_custom_call.1} parent=1 // loop_footer_branch
      %25 = sbr.rel target = $region3
    $region8: #{tpu_custom_call.1} parent=1 // loop_exit
      _
    %681 = vsyncpa [#allocation3], 1
    %s682 = scalar_lea.sflag [#allocation3], 1
    %683 = vsyncpa %s682, 1
    %684 = vsyncpa [#allocation6], 1
    %s685 = scalar_lea.sflag [#allocation6], 1
    %686 = vsyncpa %s685, 1
    %687 = vsyncpa [#allocation9], 1
    %688 = vsyncpa [#allocation12], 1
    %689 = vsyncpa [#allocation4], 1
    %s690 = scalar_lea.sflag [#allocation4], 1
    %691 = vsyncpa %s690, 1

</llo_original>
